<compile_context>
chip_gen: v7x
topology: tpu7x:2x2x1
jax: 0.10.0
libtpu: 0.0.40
codegen_flags: <defaults>
</compile_context>

<pallas_src>
import functools

import jax
import jax.numpy as jnp
from jax.experimental import pallas as pl
from jax.experimental.pallas import tpu as pltpu

LN_EPS = 1e-5  # PyTorch nn.LayerNorm default


def _round_up(x, m):
    return ((x + m - 1) // m) * m


def _tpu_generation_info():
    """Best-effort per-TensorCore VMEM capacity and TensorCore-per-device count."""
    vmem_cap = 64 * 1024 * 1024            # conservative default: v7x has 64 MiB / TC
    try:
        vmem_cap = int(pltpu.get_tpu_info().vmem_capacity_bytes)
    except Exception:
        pass
    num_tc = 2                             # conservative: assume 'parallel' axis is core-split
    try:
        kind = jax.devices()[0].device_kind.lower()
        # Single-TensorCore chips: v5e ("v5 lite") and v6e ("v6 lite"/"v6e").
        if "v5 lite" in kind or "v5e" in kind or "v6" in kind:
            num_tc = 1
    except Exception:
        pass
    return vmem_cap, num_tc


def _pick_batch_tile(B, N, Pp, Dp, Kp, vmem_budget, num_tc, rows_target=2048):
    """Largest divisor-of-B batch tile Bt such that:
       * each grid step feeds ~rows_target token rows to the MXU,
       * the per-step working set fits in `vmem_budget`,
       * >=2 grid steps remain on dual-TensorCore chips (so the 'parallel'
         grid axis gives both cores work)."""
    def fits(bt):
        rt = bt * N
        need = (2 * rt * Pp * 2            # bf16 token tile, double-buffered
                + 2 * Pp * Dp * 2          # bf16 patch-embed weight (2 bufs)
                + 3 * rt * Dp * 4          # f32 LN intermediates (h / centered / normed)
                + 2 * Dp * Kp * 2          # bf16 head weight (2 bufs)
                + 2 * bt * rt * 4          # f32 pooling matrix (2 bufs)
                + 2 * bt * Kp * 4          # f32 logits tile (2 bufs)
                + (2 << 20))               # slack (bias/affine rows, spill headroom)
        return need <= vmem_budget

    cap = max(1, rows_target // max(N, 1))
    if num_tc >= 2 and B >= 2:
        cap = min(cap, max(1, B // 2))     # keep >=2 steps only when 2 TCs exist
    cap = max(1, min(cap, B))
    for bt in range(cap, 0, -1):
        if B % bt == 0 and fits(bt):
            return bt
    return 1


def _fused_forward_kernel(x_ref, wc_ref, bc_ref, g_ref, b_ref, pool_ref,
                          wh_ref, bh_ref, o_ref, *, d_real):
    """One batch tile: patch-embed GEMM + LayerNorm + token mean-pool + head.

    x_ref   : (Rt, Pp)  bf16 token rows (Rt = Bt * N), pre-flattened in wrapper
    wc_ref  : (Pp, Dp)  bf16 patch-embed weight (zero-padded rows/cols)
    bc_ref  : (1, Dp)   f32 conv bias      (zero in pad lanes)
    g_ref   : (1, Dp)   f32 LN gamma       (zero in pad lanes)
    b_ref   : (1, Dp)   f32 LN beta        (zero in pad lanes)
    pool_ref: (Bt, Rt)  f32 per-image mean-pool matrix
    wh_ref  : (Dp, Kp)  bf16 head weight   (zero-padded rows/cols)
    bh_ref  : (1, Kp)   f32 head bias      (zero in pad lanes)
    o_ref   : (Bt, Kp)  f32 logits (lane-dense, sliced to K in the wrapper)
    """
    Dp = wc_ref.shape[1]

    # Patch-embed GEMM on the MXU, f32 accumulation.
    h = jnp.dot(x_ref[...], wc_ref[...], preferred_element_type=jnp.float32)
    h = h + bc_ref[...]                                    # (Rt, Dp) f32

    # LayerNorm over the real hidden dim.  Pad lanes of h are exactly zero
    # (zero weight columns + zero bias), so the mean reduce needs no mask.
    inv_d = jnp.float32(1.0 / d_real)
    mu = jnp.sum(h, axis=-1, keepdims=True) * inv_d
    cen = h - mu
    if d_real != Dp:                                       # static: skipped when D % 128 == 0
        lane = jax.lax.broadcasted_iota(jnp.int32, (1, Dp), 1)
        cen = jnp.where(lane < d_real, cen, 0.0)           # zero out pad lanes
    var = jnp.sum(cen * cen, axis=-1, keepdims=True) * inv_d
    hn = cen * jax.lax.rsqrt(var + LN_EPS)                 # pad lanes stay 0

    # Token mean-pool as a tiny MXU matmul: no in-kernel reshape relayout and
    # the sublane token reduce stays off the XLU.
    pooled = jnp.dot(pool_ref[...], hn, preferred_element_type=jnp.float32)  # (Bt, Dp)

    # Deferred LayerNorm affine (pooling is linear), then fused classifier head.
    pooled = pooled * g_ref[...] + b_ref[...]
    logits = jnp.dot(pooled.astype(jnp.bfloat16), wh_ref[...],
                     preferred_element_type=jnp.float32)
    o_ref[...] = (logits + bh_ref[...]).astype(o_ref.dtype)


def base_model_forward(x_nchw, params, *, patch):
    """Fused Pallas forward.

    x_nchw : (B, C, H, W) float32
    params : dict with 'conv_w' (D, C, p, p), 'conv_b' (D,),
             'ln_g' (D,), 'ln_b' (D,), 'head_w' (K, D), 'head_b' (K,)
    """
    B, C, H, W = x_nchw.shape
    p = patch
    assert H % p == 0 and W % p == 0, "spatial dims must be divisible by patch"
    D = params["conv_w"].shape[0]
    K = params["head_w"].shape[0]
    nH, nW = H // p, W // p
    N = nH * nW
    P = C * p * p
    Pp = _round_up(P, 128)   # lane-dense contraction dim
    Dp = _round_up(D, 128)   # lane-dense hidden dim
    Kp = _round_up(K, 128)   # lane-dense logits dim

    vmem_cap, num_tc = _tpu_generation_info()
    vmem_budget = max(32 * 1024 * 1024, min(int(vmem_cap * 0.75), 112 * 1024 * 1024))

    Bt = _pick_batch_tile(B, N, Pp, Dp, Kp, vmem_budget, num_tc)
    n_steps = B // Bt
    Rt = Bt * N

    # Patch extraction (NCHW -> token rows, feature order (C, kh, kw) to match
    # the flattened conv weight).  Cast to bf16 first so the XLA transpose
    # only moves half the bytes.
    # TODO(synk): this transpose is still one extra HBM read+write of the
    # activations; fusing it needs an NHWC input layout or a manual
    # per-patch-row DMA gather inside the kernel.
    xb = x_nchw.astype(jnp.bfloat16)
    patches = xb.reshape(B, C, nH, p, nW, p).transpose(0, 2, 4, 1, 3, 5)
    patches = patches.reshape(B * N, P)
    if Pp > P:
        patches = jnp.pad(patches, ((0, 0), (0, Pp - P)))
    patches = patches.reshape(n_steps, Rt, Pp)             # free reshape (row-contiguous)

    conv_w = params["conv_w"].reshape(D, P)
    wc = jnp.pad(conv_w, ((0, Dp - D), (0, Pp - P))).T.astype(jnp.bfloat16)     # (Pp, Dp)
    bc = jnp.pad(params["conv_b"], (0, Dp - D)).reshape(1, Dp).astype(jnp.float32)
    g = jnp.pad(params["ln_g"], (0, Dp - D)).reshape(1, Dp).astype(jnp.float32)
    b = jnp.pad(params["ln_b"], (0, Dp - D)).reshape(1, Dp).astype(jnp.float32)
    wh = jnp.pad(params["head_w"],
                 ((0, Kp - K), (0, Dp - D))).T.astype(jnp.bfloat16)             # (Dp, Kp)
    bh = jnp.pad(params["head_b"], (0, Kp - K)).reshape(1, Kp).astype(jnp.float32)

    # Per-image token mean-pool matrix (constant block index -> fetched once).
    pool = jnp.repeat(jnp.eye(Bt, dtype=jnp.float32), N, axis=1) / jnp.float32(N)  # (Bt, Rt)

    cparams = pltpu.CompilerParams(
        dimension_semantics=("parallel",),
        vmem_limit_bytes=vmem_budget,
    )

    logits_p = pl.pallas_call(
        functools.partial(_fused_forward_kernel, d_real=D),
        out_shape=jax.ShapeDtypeStruct((n_steps, Bt, Kp), jnp.float32),
        grid_spec=pltpu.PrefetchScalarGridSpec(
            num_scalar_prefetch=0,
            grid=(n_steps,),
            in_specs=[
                pl.BlockSpec((None, Rt, Pp), lambda i: (i, 0, 0)),   # token rows (per-step)
                pl.BlockSpec((Pp, Dp), lambda i: (0, 0)),            # patch-embed weight
                pl.BlockSpec((1, Dp), lambda i: (0, 0)),             # conv bias
                pl.BlockSpec((1, Dp), lambda i: (0, 0)),             # LN gamma
                pl.BlockSpec((1, Dp), lambda i: (0, 0)),             # LN beta
                pl.BlockSpec((Bt, Rt), lambda i: (0, 0)),            # pooling matrix
                pl.BlockSpec((Dp, Kp), lambda i: (0, 0)),            # head weight
                pl.BlockSpec((1, Kp), lambda i: (0, 0)),             # head bias
            ],
            out_specs=pl.BlockSpec((None, Bt, Kp), lambda i: (i, 0, 0)),
        ),
        compiler_params=cparams,
    )(patches, wc, bc, g, b, pool, wh, bh)

    return logits_p.reshape(B, Kp)[:, :K]


def init_params(key, *, in_ch, patch, hidden, num_classes):
    """Deterministic init mirroring BaseModel.initialize_weights():
       Conv2d -> kaiming-normal(fan_out, relu), bias=0
       LayerNorm -> weight=1, bias=0
       Linear -> trunc_normal(std=0.02), bias=0
    """
    k1, k2 = jax.random.split(key)
    fan_out = hidden * patch * patch
    conv_std = (2.0 / fan_out) ** 0.5
    conv_w = conv_std * jax.random.normal(k1, (hidden, in_ch, patch, patch), jnp.float32)
    conv_b = jnp.zeros((hidden,), jnp.float32)
    ln_g = jnp.ones((hidden,), jnp.float32)
    ln_b = jnp.zeros((hidden,), jnp.float32)
    head_w = 0.02 * jax.random.truncated_normal(k2, -2.0, 2.0, (num_classes, hidden), jnp.float32)
    head_b = jnp.zeros((num_classes,), jnp.float32)
    return dict(conv_w=conv_w, conv_b=conv_b, ln_g=ln_g, ln_b=ln_b,
                head_w=head_w, head_b=head_b)


def _reference_forward(x, params, patch):
    """Pure-f32 JAX reference of the same forward (for tolerance checking)."""
    B, C, H, W = x.shape
    p = patch
    D = params["conv_w"].shape[0]
    nH, nW = H // p, W // p
    pt = x.reshape(B, C, nH, p, nW, p).transpose(0, 2, 4, 1, 3, 5)
    pt = pt.reshape(B, nH * nW, C * p * p)
    h = pt @ params["conv_w"].reshape(D, -1).T + params["conv_b"]
    mu = jnp.mean(h, axis=-1, keepdims=True)
    var = jnp.mean((h - mu) ** 2, axis=-1, keepdims=True)
    hn = (h - mu) * jax.lax.rsqrt(var + LN_EPS) * params["ln_g"] + params["ln_b"]
    pooled = jnp.mean(hn, axis=1)
    return pooled @ params["head_w"].T + params["head_b"]


if __name__ == "__main__":
    # Small shapes consistent with an image-classifier forward.
    B, C, H, W = 2, 4, 16, 16
    PATCH = 4
    HIDDEN = 32
    NUM_CLASSES = 8

    key = jax.random.PRNGKey(0)
    kx, kp = jax.random.split(key)
    x = jax.random.normal(kx, (B, C, H, W), jnp.float32)
    params = init_params(kp, in_ch=C, patch=PATCH, hidden=HIDDEN, num_classes=NUM_CLASSES)

    # TODO(synk): checkpoint loading / metadata plumbing from BaseModel is
    # host-side I/O with no Pallas equivalent; only the forward compute is kernelized.

    fwd = jax.jit(functools.partial(base_model_forward, patch=PATCH))
    logits = fwd(x, params)
    jax.block_until_ready(logits)

    assert logits.shape == (B, NUM_CLASSES)
    assert bool(jnp.all(jnp.isfinite(logits)))
    ref = _reference_forward(x, params, PATCH)
    assert bool(jnp.allclose(logits, ref, atol=3e-2, rtol=3e-2)), (
        f"max abs err {float(jnp.max(jnp.abs(logits - ref)))}")
    print("KERNEL_OK")
</pallas_src>

<mosaic_0001>
module attributes {stable_mosaic.version = 11 : i64} {
  func.func @_fused_forward_kernel(%arg0: i32, %arg1: memref<1x16x128xbf16, #tpu.memory_space<vmem>>, %arg2: memref<128x128xbf16, #tpu.memory_space<vmem>>, %arg3: memref<1x128xf32, #tpu.memory_space<vmem>>, %arg4: memref<1x128xf32, #tpu.memory_space<vmem>>, %arg5: memref<1x128xf32, #tpu.memory_space<vmem>>, %arg6: memref<1x16xf32, #tpu.memory_space<vmem>>, %arg7: memref<128x128xbf16, #tpu.memory_space<vmem>>, %arg8: memref<1x128xf32, #tpu.memory_space<vmem>>, %arg9: memref<1x1x128xf32, #tpu.memory_space<vmem>>) attributes {dimension_semantics = [#tpu.dimension_semantics<parallel>], iteration_bounds = array<i64: 2>, scalar_prefetch = 0 : i64, scratch_operands = 0 : i64, tpu.core_type = #tpu.core_type<tc>, window_params = [{transform_indices = @transform_0, window_bounds = array<i64: 1, 16, 128>}, {pipeline_mode = #tpu.pipeline_mode<synchronous>, transform_indices = @transform_1, window_bounds = array<i64: 128, 128>}, {pipeline_mode = #tpu.pipeline_mode<synchronous>, transform_indices = @transform_2, window_bounds = array<i64: 1, 128>}, {pipeline_mode = #tpu.pipeline_mode<synchronous>, transform_indices = @transform_3, window_bounds = array<i64: 1, 128>}, {pipeline_mode = #tpu.pipeline_mode<synchronous>, transform_indices = @transform_4, window_bounds = array<i64: 1, 128>}, {pipeline_mode = #tpu.pipeline_mode<synchronous>, transform_indices = @transform_5, window_bounds = array<i64: 1, 16>}, {pipeline_mode = #tpu.pipeline_mode<synchronous>, transform_indices = @transform_6, window_bounds = array<i64: 128, 128>}, {pipeline_mode = #tpu.pipeline_mode<synchronous>, transform_indices = @transform_7, window_bounds = array<i64: 1, 128>}, {transform_indices = @transform_8, window_bounds = array<i64: 1, 1, 128>}]} {
    %c0 = arith.constant 0 : index
    %c0_0 = arith.constant 0 : index
    %c0_1 = arith.constant 0 : index
    %0 = vector.load %arg1[%c0, %c0_0, %c0_1] : memref<1x16x128xbf16, #tpu.memory_space<vmem>>, vector<1x16x128xbf16>
    %1 = vector.shape_cast %0 : vector<1x16x128xbf16> to vector<16x128xbf16>
    %c0_2 = arith.constant 0 : index
    %c0_3 = arith.constant 0 : index
    %2 = vector.load %arg2[%c0_2, %c0_3] : memref<128x128xbf16, #tpu.memory_space<vmem>>, vector<128x128xbf16>
    %cst = arith.constant dense<0.000000e+00> : vector<16x128xf32>
    %3 = tpu.matmul %1, %2, %cst {dimension_numbers = #tpu.dot_dimension_numbers<[1], [0], [0], [1], [0, 0, 1, 1], [], []>} : vector<16x128xbf16>, vector<128x128xbf16>, vector<16x128xf32> -> vector<16x128xf32>
    %c0_4 = arith.constant 0 : index
    %c0_5 = arith.constant 0 : index
    %4 = vector.load %arg3[%c0_4, %c0_5] : memref<1x128xf32, #tpu.memory_space<vmem>>, vector<1x128xf32>
    %5 = vector.broadcast %4 : vector<1x128xf32> to vector<16x128xf32>
    %6 = arith.addf %3, %5 : vector<16x128xf32>
    %cst_6 = arith.constant dense<0.000000e+00> : vector<16xf32>
    %7 = vector.multi_reduction <add>, %6, %cst_6 [1] : vector<16x128xf32> to vector<16xf32>
    %8 = vector.shape_cast %7 : vector<16xf32> to vector<16x1xf32>
    %cst_7 = arith.constant 3.125000e-02 : f32
    %9 = vector.broadcast %cst_7 : f32 to vector<16x1xf32>
    %10 = arith.mulf %8, %9 : vector<16x1xf32>
    %11 = vector.broadcast %10 : vector<16x1xf32> to vector<16x128xf32>
    %12 = arith.subf %6, %11 : vector<16x128xf32>
    %13 = tpu.iota {dimensions = array<i32: 1>} : vector<1x128xi32>
    %c32_i32 = arith.constant 32 : i32
    %14 = vector.broadcast %c32_i32 : i32 to vector<1x128xi32>
    %15 = arith.cmpi slt, %13, %14 : vector<1x128xi32>
    %cst_8 = arith.constant 0.000000e+00 : f32
    %16 = vector.shape_cast %15 : vector<1x128xi1> to vector<1x128xi1>
    %17 = vector.broadcast %16 : vector<1x128xi1> to vector<16x128xi1>
    %18 = vector.broadcast %cst_8 : f32 to vector<16x128xf32>
    %19 = arith.select %17, %12, %18 : vector<16x128xi1>, vector<16x128xf32>
    %20 = arith.mulf %19, %19 : vector<16x128xf32>
    %cst_9 = arith.constant dense<0.000000e+00> : vector<16xf32>
    %21 = vector.multi_reduction <add>, %20, %cst_9 [1] : vector<16x128xf32> to vector<16xf32>
    %22 = vector.shape_cast %21 : vector<16xf32> to vector<16x1xf32>
    %cst_10 = arith.constant 3.125000e-02 : f32
    %23 = vector.broadcast %cst_10 : f32 to vector<16x1xf32>
    %24 = arith.mulf %22, %23 : vector<16x1xf32>
    %cst_11 = arith.constant 9.99999974E-6 : f32
    %25 = vector.broadcast %cst_11 : f32 to vector<16x1xf32>
    %26 = arith.addf %24, %25 : vector<16x1xf32>
    %27 = math.rsqrt %26 : vector<16x1xf32>
    %28 = vector.broadcast %27 : vector<16x1xf32> to vector<16x128xf32>
    %29 = arith.mulf %19, %28 : vector<16x128xf32>
    %c0_12 = arith.constant 0 : index
    %c0_13 = arith.constant 0 : index
    %30 = vector.load %arg6[%c0_12, %c0_13] : memref<1x16xf32, #tpu.memory_space<vmem>>, vector<1x16xf32>
    %cst_14 = arith.constant dense<0.000000e+00> : vector<1x128xf32>
    %31 = tpu.matmul %30, %29, %cst_14 {dimension_numbers = #tpu.dot_dimension_numbers<[1], [0], [0], [1], [0, 0, 1, 1], [], []>} : vector<1x16xf32>, vector<16x128xf32>, vector<1x128xf32> -> vector<1x128xf32>
    %c0_15 = arith.constant 0 : index
    %c0_16 = arith.constant 0 : index
    %32 = vector.load %arg4[%c0_15, %c0_16] : memref<1x128xf32, #tpu.memory_space<vmem>>, vector<1x128xf32>
    %33 = arith.mulf %31, %32 : vector<1x128xf32>
    %c0_17 = arith.constant 0 : index
    %c0_18 = arith.constant 0 : index
    %34 = vector.load %arg5[%c0_17, %c0_18] : memref<1x128xf32, #tpu.memory_space<vmem>>, vector<1x128xf32>
    %35 = arith.addf %33, %34 : vector<1x128xf32>
    %36 = arith.truncf %35 : vector<1x128xf32> to vector<1x128xbf16>
    %c0_19 = arith.constant 0 : index
    %c0_20 = arith.constant 0 : index
    %37 = vector.load %arg7[%c0_19, %c0_20] : memref<128x128xbf16, #tpu.memory_space<vmem>>, vector<128x128xbf16>
    %cst_21 = arith.constant dense<0.000000e+00> : vector<1x128xf32>
    %38 = tpu.matmul %36, %37, %cst_21 {dimension_numbers = #tpu.dot_dimension_numbers<[1], [0], [0], [1], [0, 0, 1, 1], [], []>} : vector<1x128xbf16>, vector<128x128xbf16>, vector<1x128xf32> -> vector<1x128xf32>
    %c0_22 = arith.constant 0 : index
    %c0_23 = arith.constant 0 : index
    %39 = vector.load %arg8[%c0_22, %c0_23] : memref<1x128xf32, #tpu.memory_space<vmem>>, vector<1x128xf32>
    %40 = arith.addf %38, %39 : vector<1x128xf32>
    %c0_24 = arith.constant 0 : index
    %c0_25 = arith.constant 0 : index
    %c0_26 = arith.constant 0 : index
    %41 = vector.load %arg9[%c0_24, %c0_25, %c0_26] : memref<1x1x128xf32, #tpu.memory_space<vmem>>, vector<1x1x128xf32>
    %42 = vector.shape_cast %41 : vector<1x1x128xf32> to vector<1x128xf32>
    %43 = vector.shape_cast %40 : vector<1x128xf32> to vector<1x1x128xf32>
    tpu.vector_store %arg9[%c0_24, %c0_25, %c0_26], %43 {strides = array<i32>} : memref<1x1x128xf32, #tpu.memory_space<vmem>>, vector<1x1x128xf32>,
    return
  }
  func.func @transform_0(%arg0: i32) -> (i32, i32, i32) {
    %c0_i32 = arith.constant 0 : i32
    %c0_i32_0 = arith.constant 0 : i32
    %c0_i32_1 = arith.constant 0 : i32
    return %arg0, %c0_i32, %c0_i32_0 : i32, i32, i32
  }
  func.func @transform_1(%arg0: i32) -> (i32, i32) {
    %c0_i32 = arith.constant 0 : i32
    %c0_i32_0 = arith.constant 0 : i32
    %c0_i32_1 = arith.constant 0 : i32
    return %c0_i32, %c0_i32_0 : i32, i32
  }
  func.func @transform_2(%arg0: i32) -> (i32, i32) {
    %c0_i32 = arith.constant 0 : i32
    %c0_i32_0 = arith.constant 0 : i32
    %c0_i32_1 = arith.constant 0 : i32
    return %c0_i32, %c0_i32_0 : i32, i32
  }
  func.func @transform_3(%arg0: i32) -> (i32, i32) {
    %c0_i32 = arith.constant 0 : i32
    %c0_i32_0 = arith.constant 0 : i32
    %c0_i32_1 = arith.constant 0 : i32
    return %c0_i32, %c0_i32_0 : i32, i32
  }
  func.func @transform_4(%arg0: i32) -> (i32, i32) {
    %c0_i32 = arith.constant 0 : i32
    %c0_i32_0 = arith.constant 0 : i32
    %c0_i32_1 = arith.constant 0 : i32
    return %c0_i32, %c0_i32_0 : i32, i32
  }
  func.func @transform_5(%arg0: i32) -> (i32, i32) {
    %c0_i32 = arith.constant 0 : i32
    %c0_i32_0 = arith.constant 0 : i32
    %c0_i32_1 = arith.constant 0 : i32
    return %c0_i32, %c0_i32_0 : i32, i32
  }
  func.func @transform_6(%arg0: i32) -> (i32, i32) {
    %c0_i32 = arith.constant 0 : i32
    %c0_i32_0 = arith.constant 0 : i32
    %c0_i32_1 = arith.constant 0 : i32
    return %c0_i32, %c0_i32_0 : i32, i32
  }
  func.func @transform_7(%arg0: i32) -> (i32, i32) {
    %c0_i32 = arith.constant 0 : i32
    %c0_i32_0 = arith.constant 0 : i32
    %c0_i32_1 = arith.constant 0 : i32
    return %c0_i32, %c0_i32_0 : i32, i32
  }
  func.func @transform_8(%arg0: i32) -> (i32, i32, i32) {
    %c0_i32 = arith.constant 0 : i32
    %c0_i32_0 = arith.constant 0 : i32
    %c0_i32_1 = arith.constant 0 : i32
    return %arg0, %c0_i32, %c0_i32_0 : i32, i32, i32
  }
}

</mosaic_0001>

<llo_original>
// kernel: base_model_forward.1
$region0: #{base_model_forward.1}
  #allocation0 [shape = 'u32[]', space=smem, size = 0x4, offset = 0x4, fixed_abs, tag = 'smem constant byte address 0x4 - core index']
  #allocation1 [shape = 'u32[144,128]{1,0:T(1,128)}', space=vmem, size = 0x12000, scoped, tag = 'internal scratch']
  %s0 = inlined_call_operand.vmem [shape: bf16[2,16,128], index: 0, kind: input, shape index: {}]
  %s1 = inlined_call_operand.vmem [shape: bf16[128,128], index: 1, kind: input, shape index: {}]
  %s2 = inlined_call_operand.vmem [shape: f32[1,128], index: 2, kind: input, shape index: {}]
  %s3 = inlined_call_operand.vmem [shape: f32[1,128], index: 3, kind: input, shape index: {}]
  %s4 = inlined_call_operand.vmem [shape: f32[1,128], index: 4, kind: input, shape index: {}]
  %s5 = inlined_call_operand.vmem [shape: f32[1,16], index: 5, kind: input, shape index: {}]
  %s6 = inlined_call_operand.vmem [shape: bf16[128,128], index: 6, kind: input, shape index: {}]
  %s7 = inlined_call_operand.vmem [shape: f32[1,128], index: 7, kind: input, shape index: {}]
  %s8 = inlined_call_operand.hbm [shape: f32[2,1,128], index: 8, kind: output, shape index: {}]
  %s9 = sld [smem:[#allocation0]]
  $region65: #{base_model_forward.1} parent=0
    _
  %s11 = ssub.s32 1, %s9
  %s12 = scalar_select 0, %s11, %s9
  $region1: #{base_model_forward.1} parent=0
    #allocation2 [shape = 'u8[1024]{0}', space=vmem, size = 0x400, scoped, tag = 'output window, operand 0']
    #allocation3 [shape = 's32[2]{0}', space=sflag, size = 0x8, scoped, tag = 'scoped memory for base_model_forward.1']
    %13 = vsyncpa [#allocation3], 0
    %s14 = scalar_lea.sflag [#allocation3], 1
    %15 = vsyncpa %s14, 0
    loop: start=0, step=1, limit=4
    $region2: #{base_model_forward.1} parent=1 // loop_pre_header
      _
    $region3: #{base_model_forward.1} parent=1 // loop_header
      %s17 = sphi 0, %s21
      %p18 = scmp.ge.s32.totalorder %s17, 4
      %s27 = sphi 0, %s29
      %s30 = sphi 0, %s27
      %s31 = sphi 0, %s30
      %s47 = sphi 0, %s31
      %s51 = sphi 0, %s51
      %s53 = sphi 0, %s51
      %s54 = sphi 0, %s53
      %s68 = sphi 0, %s54
      %s72 = sphi 0, %s72
      %s74 = sphi 0, %s72
      %s75 = sphi 0, %s74
      %s89 = sphi 0, %s75
      %s93 = sphi 0, %s93
      %s95 = sphi 0, %s93
      %s96 = sphi 0, %s95
      %s110 = sphi 0, %s96
      %s114 = sphi 0, %s114
      %s116 = sphi 0, %s114
      %s117 = sphi 0, %s116
      %s131 = sphi 0, %s117
      %s135 = sphi 0, %s135
      %s137 = sphi 0, %s135
      %s138 = sphi 0, %s137
      %s152 = sphi 0, %s138
      %s156 = sphi 0, %s156
      %s158 = sphi 0, %s156
      %s159 = sphi 0, %s158
      %s173 = sphi 0, %s159
      %s177 = sphi 0, %s177
      %s179 = sphi 0, %s177
      %s180 = sphi 0, %s179
      %s194 = sphi 0, %s180
      %s200 = sphi 0, %s202
      %s203 = sphi 0, %s200
      %s204 = sphi 0, %s203
      %s220 = sphi 0, %s204
    $region4: #{base_model_forward.1} parent=1 // loop_header_branch
      %20 = sbr.rel (%p18) target = $region8
    $region5: #{base_model_forward.1} parent=1 // loop_body
      %s22 = ssub.s32 %s17, 1
      %s23 = ssub.s32 %s17, 2
      %s24 = sadd.s32 %s17, 1
      %s25 = ssub.s32 %s17, %s24
      %p26 = scmp.eq.s32.totalorder %s25, 0
      %s28 = sadd.s32 %s27, 1
      %s29 = scalar_select %p26, %s27, %s28
      %p32 = pneg %p26
      %p33 = scmp.eq.s32.totalorder %s17, 1
      %p34 = por %p32, %p33
      %p35 = scmp.ne.s32.totalorder %s27, %s30
      %p36 = scmp.eq.s32.totalorder %s17, 0
      %p37 = por %p35, %p36
      %p38 = scmp.ne.s32.totalorder %s27, %s30
      %p39 = scmp.eq.s32.totalorder %s22, 1
      %p40 = por %p38, %p39
      %p41 = scmp.ne.s32.totalorder %s30, %s31
      %p42 = scmp.eq.s32.totalorder %s22, 0
      %p43 = por %p41, %p42
      %p44 = scmp.ne.s32.totalorder %s30, %s31
      %p45 = scmp.eq.s32.totalorder %s23, 1
      %p46 = por %p44, %p45
      %p48 = scmp.ne.s32.totalorder %s31, %s47
      %p49 = scmp.eq.s32.totalorder %s23, 0
      %p50 = por %p48, %p49
      %s52 = sadd.s32 %s51, 1
      %p55 = scmp.eq.s32.totalorder %s17, 1
      %p56 = scmp.ne.s32.totalorder %s51, %s53
      %p57 = scmp.eq.s32.totalorder %s17, 0
      %p58 = por %p56, %p57
      %p59 = scmp.ne.s32.totalorder %s51, %s53
      %p60 = scmp.eq.s32.totalorder %s22, 1
      %p61 = por %p59, %p60
      %p62 = scmp.ne.s32.totalorder %s53, %s54
      %p63 = scmp.eq.s32.totalorder %s22, 0
      %p64 = por %p62, %p63
      %p65 = scmp.ne.s32.totalorder %s53, %s54
      %p66 = scmp.eq.s32.totalorder %s23, 1
      %p67 = por %p65, %p66
      %p69 = scmp.ne.s32.totalorder %s54, %s68
      %p70 = scmp.eq.s32.totalorder %s23, 0
      %p71 = por %p69, %p70
      %s73 = sadd.s32 %s72, 1
      %p76 = scmp.eq.s32.totalorder %s17, 1
      %p77 = scmp.ne.s32.totalorder %s72, %s74
      %p78 = scmp.eq.s32.totalorder %s17, 0
      %p79 = por %p77, %p78
      %p80 = scmp.ne.s32.totalorder %s72, %s74
      %p81 = scmp.eq.s32.totalorder %s22, 1
      %p82 = por %p80, %p81
      %p83 = scmp.ne.s32.totalorder %s74, %s75
      %p84 = scmp.eq.s32.totalorder %s22, 0
      %p85 = por %p83, %p84
      %p86 = scmp.ne.s32.totalorder %s74, %s75
      %p87 = scmp.eq.s32.totalorder %s23, 1
      %p88 = por %p86, %p87
      %p90 = scmp.ne.s32.totalorder %s75, %s89
      %p91 = scmp.eq.s32.totalorder %s23, 0
      %p92 = por %p90, %p91
      %s94 = sadd.s32 %s93, 1
      %p97 = scmp.eq.s32.totalorder %s17, 1
      %p98 = scmp.ne.s32.totalorder %s93, %s95
      %p99 = scmp.eq.s32.totalorder %s17, 0
      %p100 = por %p98, %p99
      %p101 = scmp.ne.s32.totalorder %s93, %s95
      %p102 = scmp.eq.s32.totalorder %s22, 1
      %p103 = por %p101, %p102
      %p104 = scmp.ne.s32.totalorder %s95, %s96
      %p105 = scmp.eq.s32.totalorder %s22, 0
      %p106 = por %p104, %p105
      %p107 = scmp.ne.s32.totalorder %s95, %s96
      %p108 = scmp.eq.s32.totalorder %s23, 1
      %p109 = por %p107, %p108
      %p111 = scmp.ne.s32.totalorder %s96, %s110
      %p112 = scmp.eq.s32.totalorder %s23, 0
      %p113 = por %p111, %p112
      %s115 = sadd.s32 %s114, 1
      %p118 = scmp.eq.s32.totalorder %s17, 1
      %p119 = scmp.ne.s32.totalorder %s114, %s116
      %p120 = scmp.eq.s32.totalorder %s17, 0
      %p121 = por %p119, %p120
      %p122 = scmp.ne.s32.totalorder %s114, %s116
      %p123 = scmp.eq.s32.totalorder %s22, 1
      %p124 = por %p122, %p123
      %p125 = scmp.ne.s32.totalorder %s116, %s117
      %p126 = scmp.eq.s32.totalorder %s22, 0
      %p127 = por %p125, %p126
      %p128 = scmp.ne.s32.totalorder %s116, %s117
      %p129 = scmp.eq.s32.totalorder %s23, 1
      %p130 = por %p128, %p129
      %p132 = scmp.ne.s32.totalorder %s117, %s131
      %p133 = scmp.eq.s32.totalorder %s23, 0
      %p134 = por %p132, %p133
      %s136 = sadd.s32 %s135, 1
      %p139 = scmp.eq.s32.totalorder %s17, 1
      %p140 = scmp.ne.s32.totalorder %s135, %s137
      %p141 = scmp.eq.s32.totalorder %s17, 0
      %p142 = por %p140, %p141
      %p143 = scmp.ne.s32.totalorder %s135, %s137
      %p144 = scmp.eq.s32.totalorder %s22, 1
      %p145 = por %p143, %p144
      %p146 = scmp.ne.s32.totalorder %s137, %s138
      %p147 = scmp.eq.s32.totalorder %s22, 0
      %p148 = por %p146, %p147
      %p149 = scmp.ne.s32.totalorder %s137, %s138
      %p150 = scmp.eq.s32.totalorder %s23, 1
      %p151 = por %p149, %p150
      %p153 = scmp.ne.s32.totalorder %s138, %s152
      %p154 = scmp.eq.s32.totalorder %s23, 0
      %p155 = por %p153, %p154
      %s157 = sadd.s32 %s156, 1
      %p160 = scmp.eq.s32.totalorder %s17, 1
      %p161 = scmp.ne.s32.totalorder %s156, %s158
      %p162 = scmp.eq.s32.totalorder %s17, 0
      %p163 = por %p161, %p162
      %p164 = scmp.ne.s32.totalorder %s156, %s158
      %p165 = scmp.eq.s32.totalorder %s22, 1
      %p166 = por %p164, %p165
      %p167 = scmp.ne.s32.totalorder %s158, %s159
      %p168 = scmp.eq.s32.totalorder %s22, 0
      %p169 = por %p167, %p168
      %p170 = scmp.ne.s32.totalorder %s158, %s159
      %p171 = scmp.eq.s32.totalorder %s23, 1
      %p172 = por %p170, %p171
      %p174 = scmp.ne.s32.totalorder %s159, %s173
      %p175 = scmp.eq.s32.totalorder %s23, 0
      %p176 = por %p174, %p175
      %s178 = sadd.s32 %s177, 1
      %p181 = scmp.eq.s32.totalorder %s17, 1
      %p182 = scmp.ne.s32.totalorder %s177, %s179
      %p183 = scmp.eq.s32.totalorder %s17, 0
      %p184 = por %p182, %p183
      %p185 = scmp.ne.s32.totalorder %s177, %s179
      %p186 = scmp.eq.s32.totalorder %s22, 1
      %p187 = por %p185, %p186
      %p188 = scmp.ne.s32.totalorder %s179, %s180
      %p189 = scmp.eq.s32.totalorder %s22, 0
      %p190 = por %p188, %p189
      %p191 = scmp.ne.s32.totalorder %s179, %s180
      %p192 = scmp.eq.s32.totalorder %s23, 1
      %p193 = por %p191, %p192
      %p195 = scmp.ne.s32.totalorder %s180, %s194
      %p196 = scmp.eq.s32.totalorder %s23, 0
      %p197 = por %p195, %p196
      %s198 = ssub.s32 %s17, %s24
      %p199 = scmp.eq.s32.totalorder %s198, 0
      %s201 = sadd.s32 %s200, 1
      %s202 = scalar_select %p199, %s200, %s201
      %p205 = pneg %p199
      %p206 = scmp.eq.s32.totalorder %s17, 1
      %p207 = por %p205, %p206
      %p208 = scmp.ne.s32.totalorder %s200, %s203
      %p209 = scmp.eq.s32.totalorder %s17, 0
      %p210 = por %p208, %p209
      %p211 = scmp.ne.s32.totalorder %s200, %s203
      %p212 = scmp.eq.s32.totalorder %s22, 1
      %p213 = por %p211, %p212
      %p214 = scmp.ne.s32.totalorder %s203, %s204
      %p215 = scmp.eq.s32.totalorder %s22, 0
      %p216 = por %p214, %p215
      %p217 = scmp.ne.s32.totalorder %s203, %s204
      %p218 = scmp.eq.s32.totalorder %s23, 1
      %p219 = por %p217, %p218
      %p221 = scmp.ne.s32.totalorder %s204, %s220
      %p222 = scmp.eq.s32.totalorder %s23, 0
      %p223 = por %p221, %p222
      %p224 = scmp.le.s32.totalorder 1, %s17
      %p225 = scmp.lt.s32.totalorder %s17, 3
      %p226 = pnand %p224, %p225
      %p227 = pneg %p226
      // Predicated region
      $region9: #{base_model_forward.1} parent=5 // pred_check
        _
      $region10: #{base_model_forward.1} parent=5 // pred_check_branch
        %229 = sbr.rel (%p226) target = $region12
      $region11: #{base_model_forward.1} parent=5 // pred_region
        %s230 = ssub.s32 %s17, 1
        // Predicated region
        $region13: #{base_model_forward.1} parent=11 // pred_check
          %p231 = pneg %p64
        $region14: #{base_model_forward.1} parent=11 // pred_check_branch
          %233 = sbr.rel (%p231) target = $region16
        $region15: #{base_model_forward.1} parent=11 // pred_region
          _
        $region16: #{base_model_forward.1} parent=11 // pred_fallthru
          _
        // Predicated region
        $region17: #{base_model_forward.1} parent=11 // pred_check
          %p234 = pneg %p85
        $region18: #{base_model_forward.1} parent=11 // pred_check_branch
          %236 = sbr.rel (%p234) target = $region20
        $region19: #{base_model_forward.1} parent=11 // pred_region
          _
        $region20: #{base_model_forward.1} parent=11 // pred_fallthru
          _
        // Predicated region
        $region21: #{base_model_forward.1} parent=11 // pred_check
          %p237 = pneg %p106
        $region22: #{base_model_forward.1} parent=11 // pred_check_branch
          %239 = sbr.rel (%p237) target = $region24
        $region23: #{base_model_forward.1} parent=11 // pred_region
          _
        $region24: #{base_model_forward.1} parent=11 // pred_fallthru
          _
        // Predicated region
        $region25: #{base_model_forward.1} parent=11 // pred_check
          %p240 = pneg %p127
        $region26: #{base_model_forward.1} parent=11 // pred_check_branch
          %242 = sbr.rel (%p240) target = $region28
        $region27: #{base_model_forward.1} parent=11 // pred_region
          _
        $region28: #{base_model_forward.1} parent=11 // pred_fallthru
          _
        // Predicated region
        $region29: #{base_model_forward.1} parent=11 // pred_check
          %p243 = pneg %p148
        $region30: #{base_model_forward.1} parent=11 // pred_check_branch
          %245 = sbr.rel (%p243) target = $region32
        $region31: #{base_model_forward.1} parent=11 // pred_region
          _
        $region32: #{base_model_forward.1} parent=11 // pred_fallthru
          _
        // Predicated region
        $region33: #{base_model_forward.1} parent=11 // pred_check
          %p246 = pneg %p169
        $region34: #{base_model_forward.1} parent=11 // pred_check_branch
          %248 = sbr.rel (%p246) target = $region36
        $region35: #{base_model_forward.1} parent=11 // pred_region
          _
        $region36: #{base_model_forward.1} parent=11 // pred_fallthru
          _
        // Predicated region
        $region37: #{base_model_forward.1} parent=11 // pred_check
          %p249 = pneg %p190
        $region38: #{base_model_forward.1} parent=11 // pred_check_branch
          %251 = sbr.rel (%p249) target = $region40
        $region39: #{base_model_forward.1} parent=11 // pred_region
          _
        $region40: #{base_model_forward.1} parent=11 // pred_fallthru
          _
      $region12: #{base_model_forward.1} parent=5 // pred_fallthru
        _
      %p252 = scmp.lt.s32.totalorder %s17, 2
      // Predicated region
      $region41: #{base_model_forward.1} parent=5 // pred_check
        %p253 = pneg %p252
      $region42: #{base_model_forward.1} parent=5 // pred_check_branch
        %255 = sbr.rel (%p253) target = $region44
      $region43: #{base_model_forward.1} parent=5 // pred_region
        // Predicated region
        $region45: #{base_model_forward.1} parent=43 // pred_check
          %p256 = pneg %p37
        $region46: #{base_model_forward.1} parent=43 // pred_check_branch
          %258 = sbr.rel (%p256) target = $region48
        $region47: #{base_model_forward.1} parent=43 // pred_region
          %p259 = scmp.lt.s32.totalorder %s17, 1
          %s260 = scalar_select %p259, %s17, 1
          %s261 = smul.addr %s260, 2
          %s262 = smul.addr %s261, 4
          %s263 = scalar_lea.vmem %s0, %s262
        $region48: #{base_model_forward.1} parent=43 // pred_fallthru
          _
      $region44: #{base_model_forward.1} parent=5 // pred_fallthru
        _
      %p264 = scmp.le.s32.totalorder 1, %s17
      %p265 = scmp.lt.s32.totalorder %s17, 3
      %p266 = pnand %p264, %p265
      %p267 = pneg %p266
      // Predicated region
      $region49: #{base_model_forward.1} parent=5 // pred_check
        _
      $region50: #{base_model_forward.1} parent=5 // pred_check_branch
        %269 = sbr.rel (%p266) target = $region52
      $region51: #{base_model_forward.1} parent=5 // pred_region
        %s270 = ssub.s32 %s17, 1
        %p271 = scmp.lt.s32.totalorder %s22, 1
        %s272 = scalar_select %p271, %s22, 1
        %s273 = smul.addr %s272, 2
        %s274 = smul.addr %s273, 4
        %s275 = scalar_lea.vmem %s0, %s274
        %p276 = pneg %p43
        %p277 = pneg %p40
        %p278 = pneg %p64
        %p279 = pneg %p61
        %p280 = pneg %p85
        %p281 = pneg %p82
        %p282 = pneg %p106
        %p283 = pneg %p103
        %p284 = pneg %p127
        %p285 = pneg %p124
        %p286 = pneg %p148
        %p287 = pneg %p145
        %p288 = pneg %p169
        %p289 = pneg %p166
        %p290 = pneg %p190
        %p291 = pneg %p187
        %p292 = pneg %p216
        %p293 = pneg %p213
        %s294 = sand.u32 %s203, 1
        %s295 = scalar_lea.sflag [#allocation3], %s294
        %s296 = sand.u32 %s203, 1
        %s297 = scalar_lea.vmem [#allocation2], %s296
        %p298 = scmp.lt.s32.totalorder %s22, 1
        %s299 = scalar_select %p298, %s22, 1
        %s300 = smul.addr %s299, 2
        %s301 = smul.addr %s300, 4
        %s302 = scalar_lea.vmem %s0, %s301
        %v304 = vld [vmem:[%s302] sm:$0xf]
        %v305 = vld [vmem:[%s302 + $0x4] sm:$0xf]
        %v306 = vld [vmem:[%s1] sm:$0xf]
        %v307 = vld [vmem:[%s1 + $0x4] sm:$0xf]
        %v308 = vld [vmem:[%s1 + $0x8] sm:$0xf]
        %v309 = vld [vmem:[%s1 + $0xc] sm:$0xf]
        %v310 = vld [vmem:[%s1 + $0x10] sm:$0xf]
        %v311 = vld [vmem:[%s1 + $0x14] sm:$0xf]
        %v312 = vld [vmem:[%s1 + $0x18] sm:$0xf]
        %v313 = vld [vmem:[%s1 + $0x1c] sm:$0xf]
        %v314 = vld [vmem:[%s1 + $0x20] sm:$0xf]
        %v315 = vld [vmem:[%s1 + $0x24] sm:$0xf]
        %v316 = vld [vmem:[%s1 + $0x28] sm:$0xf]
        %v317 = vld [vmem:[%s1 + $0x2c] sm:$0xf]
        %v318 = vld [vmem:[%s1 + $0x30] sm:$0xf]
        %v319 = vld [vmem:[%s1 + $0x34] sm:$0xf]
        %v320 = vld [vmem:[%s1 + $0x38] sm:$0xf]
        %v321 = vld [vmem:[%s1 + $0x3c] sm:$0xf]
        %v322 = vld [vmem:[%s2] sm:$0x1]
        %v324 = vlaneseq
        %v325 = vshrl.u32 %v324, 7
        %v326 = vsub.s32 0, %v325
        %v327 = vrot.slane %v322, %v326
        %v331 = vunpack.c.l.b16 %v304
        %v332 = vunpack.c.l.b16 %v305
        %v333 = vpack.c.b16 %v332, %v331
        %v351 = vunpack.c.l.b16 %v306
        %v352 = vunpack.c.l.b16 %v307
        %v353 = vunpack.c.l.b16 %v308
        %v354 = vunpack.c.l.b16 %v309
        %v355 = vunpack.c.l.b16 %v310
        %v356 = vunpack.c.l.b16 %v311
        %v357 = vunpack.c.l.b16 %v312
        %v358 = vunpack.c.l.b16 %v313
        %v359 = vunpack.c.l.b16 %v314
        %v360 = vunpack.c.l.b16 %v315
        %v361 = vunpack.c.l.b16 %v316
        %v362 = vunpack.c.l.b16 %v317
        %v363 = vunpack.c.l.b16 %v318
        %v364 = vunpack.c.l.b16 %v319
        %v365 = vunpack.c.l.b16 %v320
        %v366 = vunpack.c.l.b16 %v321
        %v367 = vpack.c.b16 %v352, %v351
        %v368 = vpack.c.b16 %v354, %v353
        %v369 = vpack.c.b16 %v356, %v355
        %v370 = vpack.c.b16 %v358, %v357
        %v371 = vpack.c.b16 %v360, %v359
        %v372 = vpack.c.b16 %v362, %v361
        %v373 = vpack.c.b16 %v364, %v363
        %v374 = vpack.c.b16 %v366, %v365
        %383 = vmatprep.subr.bf16.mxu0 0
        %384 = vmatpush1.bf16.msra.mxu0 %v367
        %385 = vmatprep.subr.bf16.mxu0 0
        %386 = vmatpush1.bf16.msra.mxu0 %v368
        %387 = vmatprep.subr.bf16.mxu0 0
        %388 = vmatpush1.bf16.msra.mxu0 %v369
        %389 = vmatprep.subr.bf16.mxu0 0
        %390 = vmatpush1.bf16.msra.mxu0 %v370
        %391 = vmatprep.subr.bf16.mxu0 0
        %392 = vmatpush1.bf16.msra.mxu0 %v371
        %393 = vmatprep.subr.bf16.mxu0 0
        %394 = vmatpush1.bf16.msra.mxu0 %v372
        %395 = vmatprep.subr.bf16.mxu0 0
        %396 = vmatpush1.bf16.msra.mxu0 %v373
        %397 = vmatprep.subr.bf16.mxu0 0
        %398 = vmatpush1.bf16.msra.mxu0 %v374
        %399 = vmatprep.subr.bf16.mxu0 0
        %400 = vmatpush1.bf16.msra.mxu0 0
        %401 = vmatprep.subr.bf16.mxu0 0
        %402 = vmatpush1.bf16.msra.mxu0 0
        %403 = vmatprep.subr.bf16.mxu0 0
        %404 = vmatpush1.bf16.msra.mxu0 0
        %405 = vmatprep.subr.bf16.mxu0 0
        %406 = vmatpush1.bf16.msra.mxu0 0
        %407 = vmatprep.subr.bf16.mxu0 0
        %408 = vmatpush1.bf16.msra.mxu0 0
        %409 = vmatprep.subr.bf16.mxu0 0
        %410 = vmatpush1.bf16.msra.mxu0 0
        %411 = vmatprep.subr.bf16.mxu0 0
        %412 = vmatpush1.bf16.msra.mxu0 0
        %413 = vmatprep.subr.bf16.mxu0 0
        %414 = vmatpush1.bf16.msra.mxu0 0
        %415 = vmatprep.mubr.bf16.mxu0 0
        %416 = vmatmul.mubr.bf16.gmra.mrb[0].mxu0 %v333
        %v417 = vpop.f32.mrb[0].mxu0
        %v418 = vadd.f32 %v327, %v417
        %v419 = vpop.f32.mrb[0].mxu0
        %v420 = vpop.f32.mrb[0].mxu0
        %v421 = vadd.f32 %v327, %v420
        %v422 = vpop.f32.mrb[0].mxu0
        %423 = vdwg.mxu0
        %424 = vadd.xlane.f32.xlu0 %v418
        %v425 = vpop.xlane.xlu0 %424
        %426 = vadd.xlane.f32.xlu0 %v421
        %v427 = vpop.xlane.xlu0 %426
        %v428 = vmul.f32 %v425, 0.03125
        %v429 = vmul.f32 %v427, 0.03125
        %v430 = vsub.f32 %v418, %v428
        %v431 = vsub.f32 %v421, %v429
        %v432 = vlaneseq
        %v433 = vand.u32 %v432, 127
        %vm434 = vcmp.lt.s32.totalorder %v433, 32
        %v435 = vsel %vm434, 1, 0
        %vm436 = vcmp.eq.s32.totalorder %v435, 1
        %v437 = vsel %vm436, %v430, 0.0
        %v438 = vsel %vm436, %v431, 0.0
        %v439 = vmul.f32 %v437, %v437
        %v440 = vmul.f32 %v438, %v438
        %441 = vadd.xlane.f32.xlu0 %v439
        %v442 = vpop.xlane.xlu0 %441
        %443 = vadd.xlane.f32.xlu0 %v440
        %v444 = vpop.xlane.xlu0 %443
        %v445 = vmul.f32 %v442, 0.03125
        %v446 = vmul.f32 %v444, 0.03125
        %v447 = vadd.f32 %v445, 1e-05
        %v448 = vadd.f32 %v446, 1e-05
        %v449 = vrsqrt.pop %v447
        %v450 = vrsqrt.pop %v448
        %v451 = vmul.f32 %v437, %v449
        %v452 = vmul.f32 %v438, %v450
        %v453 = vld [vmem:[%s5] sm:$0x1]
        %vm454 = vcmask 130048
        %v456 = vsel %vm454, %v453, 0
        %458 = vmatprep.subr.mxu0 0.0
        %459 = vmatpush1.msra.mxu0 %v451
        %460 = vmatprep.subr.mxu0 0.0
        %461 = vmatpush1.msra.mxu0 %v452
        %462 = vmatprep.subr.mxu0 0.0
        %463 = vmatpush1.msra.mxu0 0.0
        %464 = vmatprep.subr.mxu0 0.0
        %465 = vmatpush1.msra.mxu0 0.0
        %466 = vmatprep.subr.mxu0 0.0
        %467 = vmatpush1.msra.mxu0 0.0
        %468 = vmatprep.subr.mxu0 0.0
        %469 = vmatpush1.msra.mxu0 0.0
        %470 = vmatprep.subr.mxu0 0.0
        %471 = vmatpush1.msra.mxu0 0.0
        %472 = vmatprep.subr.mxu0 0.0
        %473 = vmatpush1.msra.mxu0 0.0
        %474 = vmatprep.subr.mxu0 0.0
        %475 = vmatpush1.msra.mxu0 0.0
        %476 = vmatprep.subr.mxu0 0.0
        %477 = vmatpush1.msra.mxu0 0.0
        %478 = vmatprep.subr.mxu0 0.0
        %479 = vmatpush1.msra.mxu0 0.0
        %480 = vmatprep.subr.mxu0 0.0
        %481 = vmatpush1.msra.mxu0 0.0
        %482 = vmatprep.subr.mxu0 0.0
        %483 = vmatpush1.msra.mxu0 0.0
        %484 = vmatprep.subr.mxu0 0.0
        %485 = vmatpush1.msra.mxu0 0.0
        %486 = vmatprep.subr.mxu0 0.0
        %487 = vmatpush1.msra.mxu0 0.0
        %488 = vmatprep.subr.mxu0 0.0
        %489 = vmatpush1.msra.mxu0 0.0
        %490 = vmatprep.subr.mxu0 0.0
        %491 = vmatpush1.msra.mxu0 0.0
        %492 = vmatprep.subr.mxu0 0.0
        %493 = vmatpush1.msra.mxu0 0.0
        %494 = vmatprep.subr.mxu0 0.0
        %495 = vmatpush1.msra.mxu0 0.0
        %496 = vmatprep.subr.mxu0 0.0
        %497 = vmatpush1.msra.mxu0 0.0
        %498 = vmatprep.subr.mxu0 0.0
        %499 = vmatpush1.msra.mxu0 0.0
        %500 = vmatprep.subr.mxu0 0.0
        %501 = vmatpush1.msra.mxu0 0.0
        %502 = vmatprep.subr.mxu0 0.0
        %503 = vmatpush1.msra.mxu0 0.0
        %504 = vmatprep.subr.mxu0 0.0
        %505 = vmatpush1.msra.mxu0 0.0
        %506 = vmatprep.subr.mxu0 0.0
        %507 = vmatpush1.msra.mxu0 0.0
        %508 = vmatprep.subr.mxu0 0.0
        %509 = vmatpush1.msra.mxu0 0.0
        %510 = vmatprep.subr.mxu0 0.0
        %511 = vmatpush1.msra.mxu0 0.0
        %512 = vmatprep.subr.mxu0 0.0
        %513 = vmatpush1.msra.mxu0 0.0
        %514 = vmatprep.subr.mxu0 0.0
        %515 = vmatpush1.msra.mxu0 0.0
        %516 = vmatprep.subr.mxu0 0.0
        %517 = vmatpush1.msra.mxu0 0.0
        %518 = vmatprep.subr.mxu0 0.0
        %519 = vmatpush1.msra.mxu0 0.0
        %520 = vmatprep.subr.mxu0 0.0
        %521 = vmatpush1.msra.mxu0 0.0
        %522 = vmatprep.mubr.f32.mxu0 0.0
        %523 = vmatmul.mubr.f32.gmra.mrb[0].mxu0 %v456
        %v524 = vpop.f32.mrb[0].mxu0
        %v525 = vadd.f32 0.0, %v524
        %v526 = vpop.f32.mrb[0].mxu0
        %527 = vdwg.mxu0
        %v528 = vld [vmem:[%s3] sm:$0x1]
        %v529 = vmul.f32 %v525, %v528
        %v530 = vld [vmem:[%s4] sm:$0x1]
        %v531 = vadd.f32 %v529, %v530
        %v532 = vpack.c.bf16 %v531, %v531
        %v533 = vld [vmem:[%s6] sm:$0xf]
        %v534 = vld [vmem:[%s6 + $0x4] sm:$0xf]
        %v535 = vld [vmem:[%s6 + $0x8] sm:$0xf]
        %v536 = vld [vmem:[%s6 + $0xc] sm:$0xf]
        %v537 = vld [vmem:[%s6 + $0x10] sm:$0xf]
        %v538 = vld [vmem:[%s6 + $0x14] sm:$0xf]
        %v539 = vld [vmem:[%s6 + $0x18] sm:$0xf]
        %v540 = vld [vmem:[%s6 + $0x1c] sm:$0xf]
        %v541 = vld [vmem:[%s6 + $0x20] sm:$0xf]
        %v542 = vld [vmem:[%s6 + $0x24] sm:$0xf]
        %v543 = vld [vmem:[%s6 + $0x28] sm:$0xf]
        %v544 = vld [vmem:[%s6 + $0x2c] sm:$0xf]
        %v545 = vld [vmem:[%s6 + $0x30] sm:$0xf]
        %v546 = vld [vmem:[%s6 + $0x34] sm:$0xf]
        %v547 = vld [vmem:[%s6 + $0x38] sm:$0xf]
        %v548 = vld [vmem:[%s6 + $0x3c] sm:$0xf]
        %v549 = vld [vmem:[%s7] sm:$0x1]
        %v566 = vunpack.c.l.b16 %v533
        %v567 = vunpack.c.l.b16 %v534
        %v568 = vunpack.c.l.b16 %v535
        %v569 = vunpack.c.l.b16 %v536
        %v570 = vunpack.c.l.b16 %v537
        %v571 = vunpack.c.l.b16 %v538
        %v572 = vunpack.c.l.b16 %v539
        %v573 = vunpack.c.l.b16 %v540
        %v574 = vunpack.c.l.b16 %v541
        %v575 = vunpack.c.l.b16 %v542
        %v576 = vunpack.c.l.b16 %v543
        %v577 = vunpack.c.l.b16 %v544
        %v578 = vunpack.c.l.b16 %v545
        %v579 = vunpack.c.l.b16 %v546
        %v580 = vunpack.c.l.b16 %v547
        %v581 = vunpack.c.l.b16 %v548
        %v582 = vpack.c.b16 %v567, %v566
        %v583 = vpack.c.b16 %v569, %v568
        %v584 = vpack.c.b16 %v571, %v570
        %v585 = vpack.c.b16 %v573, %v572
        %v586 = vpack.c.b16 %v575, %v574
        %v587 = vpack.c.b16 %v577, %v576
        %v588 = vpack.c.b16 %v579, %v578
        %v589 = vpack.c.b16 %v581, %v580
        %598 = vmatprep.subr.bf16.mxu0 0
        %599 = vmatpush1.bf16.msra.mxu0 %v582
        %600 = vmatprep.subr.bf16.mxu0 0
        %601 = vmatpush1.bf16.msra.mxu0 %v583
        %602 = vmatprep.subr.bf16.mxu0 0
        %603 = vmatpush1.bf16.msra.mxu0 %v584
        %604 = vmatprep.subr.bf16.mxu0 0
        %605 = vmatpush1.bf16.msra.mxu0 %v585
        %606 = vmatprep.subr.bf16.mxu0 0
        %607 = vmatpush1.bf16.msra.mxu0 %v586
        %608 = vmatprep.subr.bf16.mxu0 0
        %609 = vmatpush1.bf16.msra.mxu0 %v587
        %610 = vmatprep.subr.bf16.mxu0 0
        %611 = vmatpush1.bf16.msra.mxu0 %v588
        %612 = vmatprep.subr.bf16.mxu0 0
        %613 = vmatpush1.bf16.msra.mxu0 %v589
        %614 = vmatprep.subr.bf16.mxu0 0
        %615 = vmatpush1.bf16.msra.mxu0 0
        %616 = vmatprep.subr.bf16.mxu0 0
        %617 = vmatpush1.bf16.msra.mxu0 0
        %618 = vmatprep.subr.bf16.mxu0 0
        %619 = vmatpush1.bf16.msra.mxu0 0
        %620 = vmatprep.subr.bf16.mxu0 0
        %621 = vmatpush1.bf16.msra.mxu0 0
        %622 = vmatprep.subr.bf16.mxu0 0
        %623 = vmatpush1.bf16.msra.mxu0 0
        %624 = vmatprep.subr.bf16.mxu0 0
        %625 = vmatpush1.bf16.msra.mxu0 0
        %626 = vmatprep.subr.bf16.mxu0 0
        %627 = vmatpush1.bf16.msra.mxu0 0
        %628 = vmatprep.subr.bf16.mxu0 0
        %629 = vmatpush1.bf16.msra.mxu0 0
        %630 = vmatprep.mubr.bf16.mxu0 0
        %631 = vmatmul.mubr.bf16.gmra.mrb[0].mxu0 %v532
        %v632 = vpop.f32.mrb[0].mxu0
        %v633 = vadd.f32 %v549, %v632
        %v634 = vpop.f32.mrb[0].mxu0
        %v635 = vpop.f32.mrb[0].mxu0
        %v636 = vpop.f32.mrb[0].mxu0
        %637 = vdwg.mxu0
        %638 = vst [vmem:[%s297] sm:$0x1] %v633
        %s639 = sand.u32 %s203, 1
        %s640 = scalar_lea.sflag [#allocation3], %s639
        %s641 = sand.u32 %s203, 1
        %s642 = scalar_lea.vmem [#allocation2], %s641
        // Predicated region
        $region53: #{base_model_forward.1} parent=51 // pred_check
          %p643 = pneg %p213
        $region54: #{base_model_forward.1} parent=51 // pred_check_branch
          %645 = sbr.rel (%p643) target = $region56
        $region55: #{base_model_forward.1} parent=51 // pred_region
          %s647 = ssub.s32 16, 16
          %648 = vsyncadd %s640, %s647
          %s649 = smul.addr %s22, 16
          %s650 = scalar_lea.hbm %s8, %s649
          %s652 = sshll.u32 %s642, 4
          %s653 = int_to_ptr.vmem [resolvable:$true] %s652
          %655 = dma.vmem_to_hbm [thread:$0]  %s653, 16, %s650, %s640
        $region56: #{base_model_forward.1} parent=51 // pred_fallthru
          _
      $region52: #{base_model_forward.1} parent=5 // pred_fallthru
        _
      %p656 = scmp.le.s32.totalorder 2, %s17
      // Predicated region
      $region57: #{base_model_forward.1} parent=5 // pred_check
        %p657 = pneg %p656
      $region58: #{base_model_forward.1} parent=5 // pred_check_branch
        %659 = sbr.rel (%p657) target = $region60
      $region59: #{base_model_forward.1} parent=5 // pred_region
        %s660 = ssub.s32 %s17, 2
        // Predicated region
        $region61: #{base_model_forward.1} parent=59 // pred_check
          %p661 = pneg %p219
        $region62: #{base_model_forward.1} parent=59 // pred_check_branch
          %663 = sbr.rel (%p661) target = $region64
        $region63: #{base_model_forward.1} parent=59 // pred_region
          %s664 = sand.u32 %s204, 1
          %s665 = scalar_lea.sflag [#allocation3], %s664
          %s666 = sand.u32 %s204, 1
          %s667 = scalar_lea.vmem [#allocation2], %s666
          %668 = dma.done %s665, 16
        $region64: #{base_model_forward.1} parent=59 // pred_fallthru
          _
      $region60: #{base_model_forward.1} parent=5 // pred_fallthru
        _
    $region6: #{base_model_forward.1} parent=1 // loop_footer
      %s21 = sadd.s32 1, %s17
    $region7: #{base_model_forward.1} parent=1 // loop_footer_branch
      %16 = sbr.rel target = $region3
    $region8: #{base_model_forward.1} parent=1 // loop_exit
      _
    %669 = vsyncpa [#allocation3], 1
    %s670 = scalar_lea.sflag [#allocation3], 1
    %671 = vsyncpa %s670, 1

</llo_original>
